<compile_context>
chip_gen: v5e
topology: v5e:2x2
jax: 0.10.0
libtpu: 0.0.40
codegen_flags: <defaults>
</compile_context>

<pallas_src>
import jax
import jax.numpy as jnp
from jax.experimental import pallas as pl
from jax.experimental.pallas import tpu as pltpu

# ----------------------------- problem sizes (small, deterministic) -----------------------------
B = 2            # batch
N = 8            # number of nodes per graph
M_DIM = 8        # node feature / atom-type dim
E_IN = 4         # edge categories in the raw adj tensor (incl. "no bond")
E = E_IN - 1     # edge types after the [:, :, :, 1:] slice  (== b_dim)
GRAPH_CONV_DIM = (32, 16)   # graph_conv_dim
AUX_DIM = 32                # aux_dim
LINEAR_DIM = (32, 16)       # linear_dim
U1, U2 = GRAPH_CONV_DIM
L1, L2 = LINEAR_DIM
BN = B * N
LANE = 128

PARAM_ORDER = (
    "g1_wadj", "g1_badj", "g1_wlin", "g1_blin",
    "g2_wadj", "g2_badj", "g2_wlin", "g2_blin",
    "wi_h", "wi_n", "bi", "wj_h", "wj_n", "bj",
    "d1_w", "d1_b", "d2_w", "d2_b", "ow", "ob",
)

# ----------------------------------- packed-weight slab layout ----------------------------------
def _round8(r):
    return ((r + 7) // 8) * 8

# (name, logical rows, lane width read by the kernel). Every multi-block entry puts each logical
# sub-block at the start of its own 128-lane group so all in-kernel slices are vreg-aligned.
_SLAB_SPECS = [
    ("w1",  M_DIM,   (E + 1) * LANE),   # [W1_e0 | W1_e1 | W1_e2 | W1_lin], one 128-lane group each
    ("b1",  1,       (E + 1) * LANE),
    ("w2",  U1,      (E + 1) * LANE),   # [W2_e0 | W2_e1 | W2_e2 | W2_lin]
    ("b2",  1,       (E + 1) * LANE),
    ("wh",  U2,      2 * LANE),         # [wi_h | wj_h]  (groups 0 / 1)
    ("wn",  M_DIM,   2 * LANE),         # [wi_n | wj_n]
    ("bij", 1,       2 * LANE),         # [bi   | bj  ]
    ("seg", B,       BN),               # per-graph node-sum segment matrix (B, BN)
    ("d1w", AUX_DIM, LANE),
    ("d1b", 1,       LANE),
    ("d2w", L1,      LANE),             # zero-padded to 128 output lanes
    ("d2b", 1,       LANE),
    ("oww", L2,      LANE),             # fused [I_L2 | ow] pass-through + logit head
    ("obb", 1,       LANE),             # ob at lane L2
]
SLAB_LAYOUT = {}
_off = 0
for _name, _rows, _width in _SLAB_SPECS:
    SLAB_LAYOUT[_name] = (_off, _rows, _width)
    _off += _round8(_rows)
SLAB_ROWS = _round8(_off)
SLAB_LANES = (E + 1) * LANE


# ----------------------------------------- Pallas kernel ----------------------------------------
def discriminator_kernel(node_ref, adj_ref, slab_ref, out_ref, adj_bd_ref):
    f32 = jnp.float32

    def slab(name):
        off, r, c = SLAB_LAYOUT[name]
        return slab_ref[off:off + r, :c]

    # Block-diagonal adjacency (E x (BN, BN)), built once in VMEM with E*B static sub-block stores
    # and reused by both GCN layers (replaces the wrapper-side einsum/reshape fusions).
    adj_bd_ref[...] = jnp.zeros_like(adj_bd_ref)
    for e in range(E):
        for b in range(B):
            adj_bd_ref[e, b * N:(b + 1) * N, b * N:(b + 1) * N] = adj_ref[e, b, :, :]

    node = node_ref[...]                                             # (BN, M_DIM)

    def gcn_layer(ann, wname, bname, u):
        # One fused matmul over (E+1) vreg-aligned 128-lane groups: [W_e0 | W_e1 | W_e2 | W_lin].
        # Padded weight/bias lanes are exactly zero, so every group's lanes >= u are exactly 0.
        h_all = jnp.dot(ann, slab(wname), preferred_element_type=f32) + slab(bname)  # (BN, 4*128)
        prop = jnp.dot(adj_bd_ref[0], h_all[:, 0:LANE], preferred_element_type=f32)
        for e in range(1, E):                                        # static unroll
            prop = prop + jnp.dot(adj_bd_ref[e], h_all[:, e * LANE:(e + 1) * LANE],
                                  preferred_element_type=f32)
        lin = h_all[:, E * LANE:(E + 1) * LANE]
        return jnp.tanh(prop + lin)[:, :u]                           # offset-0 prefix slice

    h1 = gcn_layer(node, "w1", "b1", U1)                             # (BN, U1)
    h2 = gcn_layer(h1, "w2", "b2", U2)                               # (BN, U2)

    # Graph aggregation. annotations = concat([h2, node], -1); split-weight form is identical.
    # Gates live in two vreg-aligned 128-lane groups: [i-preact | j-preact].
    ij = (jnp.dot(h2, slab("wh"), preferred_element_type=f32)
          + jnp.dot(node, slab("wn"), preferred_element_type=f32)
          + slab("bij"))                                             # (BN, 256)
    gate = jax.nn.sigmoid(ij[:, :LANE]) * jnp.tanh(ij[:, LANE:])     # lanes >= AUX are exactly 0
    hg = jnp.tanh(jnp.dot(slab("seg"), gate, preferred_element_type=f32))   # (B, 128)

    # MultiDenseLayer (Tanh after each linear); padded lanes stay exactly 0 (tanh(0) = 0).
    hd = jnp.tanh(jnp.dot(hg[:, :AUX_DIM], slab("d1w"), preferred_element_type=f32) + slab("d1b"))
    hd = jnp.tanh(jnp.dot(hd[:, :L1], slab("d2w"), preferred_element_type=f32) + slab("d2b"))

    # Fused pass-through + logit head: lanes [0, L2) = h, lane L2 = logit, lanes > L2 = 0.
    out_ref[...] = (jnp.dot(hd[:, :L2], slab("oww"), preferred_element_type=f32) + slab("obb"))


# ------------------------------------------- wrapper --------------------------------------------
@jax.jit
def discriminator_forward(adj_raw, node, slab):
    """adj_raw: (B, N, N, E_IN), node: (B, N, M_DIM). Returns (output (B, 1), h (B, L2))."""
    node2 = node.astype(jnp.float32).reshape(BN, M_DIM)
    # torch: adj[:, :, :, 1:].permute(0, 3, 1, 2); we hand (E, B, N, N) to the kernel and build the
    # block-diagonal form in-kernel.
    adj_perm = jnp.transpose(adj_raw[:, :, :, 1:].astype(jnp.float32), (3, 0, 1, 2))

    out_slab = pl.pallas_call(
        discriminator_kernel,
        out_shape=jax.ShapeDtypeStruct((B, LANE), jnp.float32),
        scratch_shapes=[pltpu.VMEM((E, BN, BN), jnp.float32)],
    )(node2, adj_perm, slab)

    h = out_slab[:, :L2]                 # (B, L2)   MultiDenseLayer features
    out = out_slab[:, L2:L2 + 1]         # (B, 1)    logit (no activation)
    return out, h


# -------------------------------- host-side parameter packing -----------------------------------
def pack_params(params):
    """Pack all weights into one vreg-aligned f32 slab (single kernel input / single DMA).
    The slab is zero-initialized, so every padded row/lane is exactly 0 — required for the
    lane-padding tricks in the kernel (tanh(0)=0, sigmoid(0)*tanh(0)=0)."""
    slab = jnp.zeros((SLAB_ROWS, SLAB_LANES), jnp.float32)

    def put(s, name, val, lane_off=0):
        off, _, _ = SLAB_LAYOUT[name]
        v = jnp.asarray(val, jnp.float32)
        return s.at[off:off + v.shape[0], lane_off:lane_off + v.shape[1]].set(v)

    # GCN layers: per-edge weights + "self" linear, each in its own 128-lane group.
    for g in range(E):
        slab = put(slab, "w1", params["g1_wadj"][g], g * LANE)
        slab = put(slab, "b1", params["g1_badj"][g], g * LANE)
        slab = put(slab, "w2", params["g2_wadj"][g], g * LANE)
        slab = put(slab, "b2", params["g2_badj"][g], g * LANE)
    slab = put(slab, "w1", params["g1_wlin"], E * LANE)
    slab = put(slab, "b1", params["g1_blin"], E * LANE)
    slab = put(slab, "w2", params["g2_wlin"], E * LANE)
    slab = put(slab, "b2", params["g2_blin"], E * LANE)

    # Aggregation gates: group 0 = i (sigmoid), group 1 = j (tanh).
    slab = put(slab, "wh", params["wi_h"], 0)
    slab = put(slab, "wh", params["wj_h"], LANE)
    slab = put(slab, "wn", params["wi_n"], 0)
    slab = put(slab, "wn", params["wj_n"], LANE)
    slab = put(slab, "bij", params["bi"], 0)
    slab = put(slab, "bij", params["bj"], LANE)

    # Per-graph node-sum segment matrix (B, BN).
    slab = put(slab, "seg", jnp.repeat(jnp.eye(B, dtype=jnp.float32), N, axis=1))

    # MultiDenseLayer.
    slab = put(slab, "d1w", params["d1_w"])
    slab = put(slab, "d1b", params["d1_b"])
    slab = put(slab, "d2w", params["d2_w"])
    slab = put(slab, "d2b", params["d2_b"])

    # Fused pass-through + logit head: [ I_L2 | ow ] so the kernel's single (B, 128) output slab
    # carries h in lanes [0, L2) and the logit in lane L2.
    slab = put(slab, "oww", jnp.eye(L2, dtype=jnp.float32), 0)
    slab = put(slab, "oww", params["ow"], L2)
    slab = put(slab, "obb", params["ob"], L2)
    return slab


# ------------------------------------- deterministic params -------------------------------------
def make_params(key):
    keys = jax.random.split(key, len(PARAM_ORDER))
    shapes = {
        "g1_wadj": (E, M_DIM, U1), "g1_badj": (E, 1, U1), "g1_wlin": (M_DIM, U1), "g1_blin": (1, U1),
        "g2_wadj": (E, U1, U2),    "g2_badj": (E, 1, U2), "g2_wlin": (U1, U2),    "g2_blin": (1, U2),
        "wi_h": (U2, AUX_DIM), "wi_n": (M_DIM, AUX_DIM), "bi": (1, AUX_DIM),
        "wj_h": (U2, AUX_DIM), "wj_n": (M_DIM, AUX_DIM), "bj": (1, AUX_DIM),
        "d1_w": (AUX_DIM, L1), "d1_b": (1, L1),
        "d2_w": (L1, L2),      "d2_b": (1, L2),
        "ow": (L2, 1),         "ob": (1, 1),
    }
    params = {}
    for k, sub in zip(PARAM_ORDER, keys):
        params[k] = 0.1 * jax.random.normal(sub, shapes[k], dtype=jnp.float32)
    return params


# ------------------------------------- pure-JAX reference ---------------------------------------
def reference_forward(adj_raw, node, params):
    adj = jnp.transpose(adj_raw[:, :, :, 1:], (0, 3, 1, 2))               # (B, E, N, N)
    ann = node
    for wadj, badj, wlin, blin in (
        (params["g1_wadj"], params["g1_badj"], params["g1_wlin"], params["g1_blin"]),
        (params["g2_wadj"], params["g2_badj"], params["g2_wlin"], params["g2_blin"]),
    ):
        stacked = jnp.einsum("bnf,efu->benu", ann, wadj) + badj[None]     # (B, E, N, U)
        prop = jnp.einsum("benm,bemu->benu", adj, stacked)
        out_sum = prop.sum(axis=1)
        lin2 = jnp.einsum("bnf,fu->bnu", ann, wlin) + blin[None]
        ann = jnp.tanh(out_sum + lin2)
    h1 = ann                                                              # (B, N, U2)

    annot = jnp.concatenate([h1, node], axis=-1)                          # (B, N, U2+M)
    wi = jnp.concatenate([params["wi_h"], params["wi_n"]], axis=0)
    wj = jnp.concatenate([params["wj_h"], params["wj_n"]], axis=0)
    i = jax.nn.sigmoid(annot @ wi + params["bi"])
    j = jnp.tanh(annot @ wj + params["bj"])
    hg = jnp.tanh(jnp.sum(i * j, axis=1))                                 # (B, AUX)

    hd = jnp.tanh(hg @ params["d1_w"] + params["d1_b"])
    hd = jnp.tanh(hd @ params["d2_w"] + params["d2_b"])
    out = hd @ params["ow"] + params["ob"]
    return out, hd


# --------------------------------------------- main ---------------------------------------------
if __name__ == "__main__":
    key = jax.random.PRNGKey(0)
    k_adj, k_node, k_params = jax.random.split(key, 3)

    # Raw inputs (shapes implied by the module): adj (B, N, N, E_IN), node (B, N, M_DIM)
    adj_raw = jax.nn.softmax(jax.random.normal(k_adj, (B, N, N, E_IN), dtype=jnp.float32), axis=-1)
    node = jax.nn.softmax(jax.random.normal(k_node, (B, N, M_DIM), dtype=jnp.float32), axis=-1)
    params = make_params(k_params)
    slab = pack_params(params)

    out, h = discriminator_forward(adj_raw, node, slab)
    jax.block_until_ready((out, h))

    with jax.default_matmul_precision("highest"):
        out_ref, h_ref = reference_forward(adj_raw, node, params)
        jax.block_until_ready((out_ref, h_ref))

    assert out.shape == (B, 1) and h.shape == (B, L2)
    assert jnp.allclose(out, out_ref, atol=1e-4, rtol=1e-4), float(jnp.max(jnp.abs(out - out_ref)))
    assert jnp.allclose(h, h_ref, atol=1e-4, rtol=1e-4), float(jnp.max(jnp.abs(h - h_ref)))

    print("KERNEL_OK")
</pallas_src>

<mosaic_0001>
module attributes {stable_mosaic.version = 11 : i64} {
  func.func @discriminator_kernel(%arg0: memref<16x8xf32, #tpu.memory_space<vmem>>, %arg1: memref<3x2x8x8xf32, #tpu.memory_space<vmem>>, %arg2: memref<200x512xf32, #tpu.memory_space<vmem>>, %arg3: memref<2x128xf32, #tpu.memory_space<vmem>>, %arg4: memref<3x16x16xf32, #tpu.memory_space<vmem>>) attributes {dimension_semantics = [], scalar_prefetch = 0 : i64, scratch_operands = 1 : i64, tpu.core_type = #tpu.core_type<tc>} {
    %cst = arith.constant 0.000000e+00 : f32
    %0 = vector.broadcast %cst : f32 to vector<3x16x16xf32>
    %c0 = arith.constant 0 : index
    %c0_0 = arith.constant 0 : index
    %c0_1 = arith.constant 0 : index
    %1 = vector.load %arg4[%c0, %c0_0, %c0_1] : memref<3x16x16xf32, #tpu.memory_space<vmem>>, vector<3x16x16xf32>
    tpu.vector_store %arg4[%c0, %c0_0, %c0_1], %0 {strides = array<i32>} : memref<3x16x16xf32, #tpu.memory_space<vmem>>, vector<3x16x16xf32>,
    %c0_2 = arith.constant 0 : index
    %c0_3 = arith.constant 0 : index
    %c0_4 = arith.constant 0 : index
    %c0_5 = arith.constant 0 : index
    %2 = vector.load %arg1[%c0_2, %c0_3, %c0_4, %c0_5] : memref<3x2x8x8xf32, #tpu.memory_space<vmem>>, vector<1x1x8x8xf32>
    %3 = vector.shape_cast %2 : vector<1x1x8x8xf32> to vector<8x8xf32>
    %c0_6 = arith.constant 0 : index
    %c0_7 = arith.constant 0 : index
    %c0_8 = arith.constant 0 : index
    %4 = vector.load %arg4[%c0_6, %c0_7, %c0_8] : memref<3x16x16xf32, #tpu.memory_space<vmem>>, vector<1x8x8xf32>
    %5 = vector.shape_cast %4 : vector<1x8x8xf32> to vector<8x8xf32>
    %6 = vector.shape_cast %3 : vector<8x8xf32> to vector<1x8x8xf32>
    tpu.vector_store %arg4[%c0_6, %c0_7, %c0_8], %6 {strides = array<i32>} : memref<3x16x16xf32, #tpu.memory_space<vmem>>, vector<1x8x8xf32>,
    %c0_9 = arith.constant 0 : index
    %c1 = arith.constant 1 : index
    %c0_10 = arith.constant 0 : index
    %c0_11 = arith.constant 0 : index
    %7 = vector.load %arg1[%c0_9, %c1, %c0_10, %c0_11] : memref<3x2x8x8xf32, #tpu.memory_space<vmem>>, vector<1x1x8x8xf32>
    %8 = vector.shape_cast %7 : vector<1x1x8x8xf32> to vector<8x8xf32>
    %c0_12 = arith.constant 0 : index
    %c8 = arith.constant 8 : index
    %c8_13 = arith.constant 8 : index
    %9 = vector.load %arg4[%c0_12, %c8, %c8_13] : memref<3x16x16xf32, #tpu.memory_space<vmem>>, vector<1x8x8xf32>
    %10 = vector.shape_cast %9 : vector<1x8x8xf32> to vector<8x8xf32>
    %11 = vector.shape_cast %8 : vector<8x8xf32> to vector<1x8x8xf32>
    tpu.vector_store %arg4[%c0_12, %c8, %c8_13], %11 {strides = array<i32>} : memref<3x16x16xf32, #tpu.memory_space<vmem>>, vector<1x8x8xf32>,
    %c1_14 = arith.constant 1 : index
    %c0_15 = arith.constant 0 : index
    %c0_16 = arith.constant 0 : index
    %c0_17 = arith.constant 0 : index
    %12 = vector.load %arg1[%c1_14, %c0_15, %c0_16, %c0_17] : memref<3x2x8x8xf32, #tpu.memory_space<vmem>>, vector<1x1x8x8xf32>
    %13 = vector.shape_cast %12 : vector<1x1x8x8xf32> to vector<8x8xf32>
    %c1_18 = arith.constant 1 : index
    %c0_19 = arith.constant 0 : index
    %c0_20 = arith.constant 0 : index
    %14 = vector.load %arg4[%c1_18, %c0_19, %c0_20] : memref<3x16x16xf32, #tpu.memory_space<vmem>>, vector<1x8x8xf32>
    %15 = vector.shape_cast %14 : vector<1x8x8xf32> to vector<8x8xf32>
    %16 = vector.shape_cast %13 : vector<8x8xf32> to vector<1x8x8xf32>
    tpu.vector_store %arg4[%c1_18, %c0_19, %c0_20], %16 {strides = array<i32>} : memref<3x16x16xf32, #tpu.memory_space<vmem>>, vector<1x8x8xf32>,
    %c1_21 = arith.constant 1 : index
    %c1_22 = arith.constant 1 : index
    %c0_23 = arith.constant 0 : index
    %c0_24 = arith.constant 0 : index
    %17 = vector.load %arg1[%c1_21, %c1_22, %c0_23, %c0_24] : memref<3x2x8x8xf32, #tpu.memory_space<vmem>>, vector<1x1x8x8xf32>
    %18 = vector.shape_cast %17 : vector<1x1x8x8xf32> to vector<8x8xf32>
    %c1_25 = arith.constant 1 : index
    %c8_26 = arith.constant 8 : index
    %c8_27 = arith.constant 8 : index
    %19 = vector.load %arg4[%c1_25, %c8_26, %c8_27] : memref<3x16x16xf32, #tpu.memory_space<vmem>>, vector<1x8x8xf32>
    %20 = vector.shape_cast %19 : vector<1x8x8xf32> to vector<8x8xf32>
    %21 = vector.shape_cast %18 : vector<8x8xf32> to vector<1x8x8xf32>
    tpu.vector_store %arg4[%c1_25, %c8_26, %c8_27], %21 {strides = array<i32>} : memref<3x16x16xf32, #tpu.memory_space<vmem>>, vector<1x8x8xf32>,
    %c2 = arith.constant 2 : index
    %c0_28 = arith.constant 0 : index
    %c0_29 = arith.constant 0 : index
    %c0_30 = arith.constant 0 : index
    %22 = vector.load %arg1[%c2, %c0_28, %c0_29, %c0_30] : memref<3x2x8x8xf32, #tpu.memory_space<vmem>>, vector<1x1x8x8xf32>
    %23 = vector.shape_cast %22 : vector<1x1x8x8xf32> to vector<8x8xf32>
    %c2_31 = arith.constant 2 : index
    %c0_32 = arith.constant 0 : index
    %c0_33 = arith.constant 0 : index
    %24 = vector.load %arg4[%c2_31, %c0_32, %c0_33] : memref<3x16x16xf32, #tpu.memory_space<vmem>>, vector<1x8x8xf32>
    %25 = vector.shape_cast %24 : vector<1x8x8xf32> to vector<8x8xf32>
    %26 = vector.shape_cast %23 : vector<8x8xf32> to vector<1x8x8xf32>
    tpu.vector_store %arg4[%c2_31, %c0_32, %c0_33], %26 {strides = array<i32>} : memref<3x16x16xf32, #tpu.memory_space<vmem>>, vector<1x8x8xf32>,
    %c2_34 = arith.constant 2 : index
    %c1_35 = arith.constant 1 : index
    %c0_36 = arith.constant 0 : index
    %c0_37 = arith.constant 0 : index
    %27 = vector.load %arg1[%c2_34, %c1_35, %c0_36, %c0_37] : memref<3x2x8x8xf32, #tpu.memory_space<vmem>>, vector<1x1x8x8xf32>
    %28 = vector.shape_cast %27 : vector<1x1x8x8xf32> to vector<8x8xf32>
    %c2_38 = arith.constant 2 : index
    %c8_39 = arith.constant 8 : index
    %c8_40 = arith.constant 8 : index
    %29 = vector.load %arg4[%c2_38, %c8_39, %c8_40] : memref<3x16x16xf32, #tpu.memory_space<vmem>>, vector<1x8x8xf32>
    %30 = vector.shape_cast %29 : vector<1x8x8xf32> to vector<8x8xf32>
    %31 = vector.shape_cast %28 : vector<8x8xf32> to vector<1x8x8xf32>
    tpu.vector_store %arg4[%c2_38, %c8_39, %c8_40], %31 {strides = array<i32>} : memref<3x16x16xf32, #tpu.memory_space<vmem>>, vector<1x8x8xf32>,
    %c0_41 = arith.constant 0 : index
    %c0_42 = arith.constant 0 : index
    %32 = vector.load %arg0[%c0_41, %c0_42] : memref<16x8xf32, #tpu.memory_space<vmem>>, vector<16x8xf32>
    %c0_43 = arith.constant 0 : index
    %c0_44 = arith.constant 0 : index
    %33 = vector.load %arg2[%c0_43, %c0_44] : memref<200x512xf32, #tpu.memory_space<vmem>>, vector<8x512xf32>
    %cst_45 = arith.constant dense<0.000000e+00> : vector<16x512xf32>
    %34 = tpu.matmul %32, %33, %cst_45 {dimension_numbers = #tpu.dot_dimension_numbers<[1], [0], [0], [1], [0, 0, 1, 1], [], []>} : vector<16x8xf32>, vector<8x512xf32>, vector<16x512xf32> -> vector<16x512xf32>
    %c8_46 = arith.constant 8 : index
    %c0_47 = arith.constant 0 : index
    %35 = vector.load %arg2[%c8_46, %c0_47] : memref<200x512xf32, #tpu.memory_space<vmem>>, vector<1x512xf32>
    %36 = vector.broadcast %35 : vector<1x512xf32> to vector<16x512xf32>
    %37 = arith.addf %34, %36 : vector<16x512xf32>
    %c0_48 = arith.constant 0 : index
    %c0_49 = arith.constant 0 : index
    %c0_50 = arith.constant 0 : index
    %38 = vector.load %arg4[%c0_48, %c0_49, %c0_50] : memref<3x16x16xf32, #tpu.memory_space<vmem>>, vector<1x16x16xf32>
    %39 = vector.shape_cast %38 : vector<1x16x16xf32> to vector<16x16xf32>
    %40 = vector.extract_strided_slice %37 {offsets = [0, 0], sizes = [16, 128], strides = [1, 1]} : vector<16x512xf32> to vector<16x128xf32>
    %cst_51 = arith.constant dense<0.000000e+00> : vector<16x128xf32>
    %41 = tpu.matmul %39, %40, %cst_51 {dimension_numbers = #tpu.dot_dimension_numbers<[1], [0], [0], [1], [0, 0, 1, 1], [], []>} : vector<16x16xf32>, vector<16x128xf32>, vector<16x128xf32> -> vector<16x128xf32>
    %c1_52 = arith.constant 1 : index
    %c0_53 = arith.constant 0 : index
    %c0_54 = arith.constant 0 : index
    %42 = vector.load %arg4[%c1_52, %c0_53, %c0_54] : memref<3x16x16xf32, #tpu.memory_space<vmem>>, vector<1x16x16xf32>
    %43 = vector.shape_cast %42 : vector<1x16x16xf32> to vector<16x16xf32>
    %44 = vector.extract_strided_slice %37 {offsets = [0, 128], sizes = [16, 128], strides = [1, 1]} : vector<16x512xf32> to vector<16x128xf32>
    %cst_55 = arith.constant dense<0.000000e+00> : vector<16x128xf32>
    %45 = tpu.matmul %43, %44, %cst_55 {dimension_numbers = #tpu.dot_dimension_numbers<[1], [0], [0], [1], [0, 0, 1, 1], [], []>} : vector<16x16xf32>, vector<16x128xf32>, vector<16x128xf32> -> vector<16x128xf32>
    %46 = arith.addf %41, %45 : vector<16x128xf32>
    %c2_56 = arith.constant 2 : index
    %c0_57 = arith.constant 0 : index
    %c0_58 = arith.constant 0 : index
    %47 = vector.load %arg4[%c2_56, %c0_57, %c0_58] : memref<3x16x16xf32, #tpu.memory_space<vmem>>, vector<1x16x16xf32>
    %48 = vector.shape_cast %47 : vector<1x16x16xf32> to vector<16x16xf32>
    %49 = vector.extract_strided_slice %37 {offsets = [0, 256], sizes = [16, 128], strides = [1, 1]} : vector<16x512xf32> to vector<16x128xf32>
    %cst_59 = arith.constant dense<0.000000e+00> : vector<16x128xf32>
    %50 = tpu.matmul %48, %49, %cst_59 {dimension_numbers = #tpu.dot_dimension_numbers<[1], [0], [0], [1], [0, 0, 1, 1], [], []>} : vector<16x16xf32>, vector<16x128xf32>, vector<16x128xf32> -> vector<16x128xf32>
    %51 = arith.addf %46, %50 : vector<16x128xf32>
    %52 = vector.extract_strided_slice %37 {offsets = [0, 384], sizes = [16, 128], strides = [1, 1]} : vector<16x512xf32> to vector<16x128xf32>
    %53 = arith.addf %51, %52 : vector<16x128xf32>
    %54 = math.tanh %53 : vector<16x128xf32>
    %55 = vector.extract_strided_slice %54 {offsets = [0, 0], sizes = [16, 32], strides = [1, 1]} : vector<16x128xf32> to vector<16x32xf32>
    %c16 = arith.constant 16 : index
    %c0_60 = arith.constant 0 : index
    %56 = vector.load %arg2[%c16, %c0_60] : memref<200x512xf32, #tpu.memory_space<vmem>>, vector<32x512xf32>
    %cst_61 = arith.constant dense<0.000000e+00> : vector<16x512xf32>
    %57 = tpu.matmul %55, %56, %cst_61 {dimension_numbers = #tpu.dot_dimension_numbers<[1], [0], [0], [1], [0, 0, 1, 1], [], []>} : vector<16x32xf32>, vector<32x512xf32>, vector<16x512xf32> -> vector<16x512xf32>
    %c48 = arith.constant 48 : index
    %c0_62 = arith.constant 0 : index
    %58 = vector.load %arg2[%c48, %c0_62] : memref<200x512xf32, #tpu.memory_space<vmem>>, vector<1x512xf32>
    %59 = vector.broadcast %58 : vector<1x512xf32> to vector<16x512xf32>
    %60 = arith.addf %57, %59 : vector<16x512xf32>
    %c0_63 = arith.constant 0 : index
    %c0_64 = arith.constant 0 : index
    %c0_65 = arith.constant 0 : index
    %61 = vector.load %arg4[%c0_63, %c0_64, %c0_65] : memref<3x16x16xf32, #tpu.memory_space<vmem>>, vector<1x16x16xf32>
    %62 = vector.shape_cast %61 : vector<1x16x16xf32> to vector<16x16xf32>
    %63 = vector.extract_strided_slice %60 {offsets = [0, 0], sizes = [16, 128], strides = [1, 1]} : vector<16x512xf32> to vector<16x128xf32>
    %cst_66 = arith.constant dense<0.000000e+00> : vector<16x128xf32>
    %64 = tpu.matmul %62, %63, %cst_66 {dimension_numbers = #tpu.dot_dimension_numbers<[1], [0], [0], [1], [0, 0, 1, 1], [], []>} : vector<16x16xf32>, vector<16x128xf32>, vector<16x128xf32> -> vector<16x128xf32>
    %c1_67 = arith.constant 1 : index
    %c0_68 = arith.constant 0 : index
    %c0_69 = arith.constant 0 : index
    %65 = vector.load %arg4[%c1_67, %c0_68, %c0_69] : memref<3x16x16xf32, #tpu.memory_space<vmem>>, vector<1x16x16xf32>
    %66 = vector.shape_cast %65 : vector<1x16x16xf32> to vector<16x16xf32>
    %67 = vector.extract_strided_slice %60 {offsets = [0, 128], sizes = [16, 128], strides = [1, 1]} : vector<16x512xf32> to vector<16x128xf32>
    %cst_70 = arith.constant dense<0.000000e+00> : vector<16x128xf32>
    %68 = tpu.matmul %66, %67, %cst_70 {dimension_numbers = #tpu.dot_dimension_numbers<[1], [0], [0], [1], [0, 0, 1, 1], [], []>} : vector<16x16xf32>, vector<16x128xf32>, vector<16x128xf32> -> vector<16x128xf32>
    %69 = arith.addf %64, %68 : vector<16x128xf32>
    %c2_71 = arith.constant 2 : index
    %c0_72 = arith.constant 0 : index
    %c0_73 = arith.constant 0 : index
    %70 = vector.load %arg4[%c2_71, %c0_72, %c0_73] : memref<3x16x16xf32, #tpu.memory_space<vmem>>, vector<1x16x16xf32>
    %71 = vector.shape_cast %70 : vector<1x16x16xf32> to vector<16x16xf32>
    %72 = vector.extract_strided_slice %60 {offsets = [0, 256], sizes = [16, 128], strides = [1, 1]} : vector<16x512xf32> to vector<16x128xf32>
    %cst_74 = arith.constant dense<0.000000e+00> : vector<16x128xf32>
    %73 = tpu.matmul %71, %72, %cst_74 {dimension_numbers = #tpu.dot_dimension_numbers<[1], [0], [0], [1], [0, 0, 1, 1], [], []>} : vector<16x16xf32>, vector<16x128xf32>, vector<16x128xf32> -> vector<16x128xf32>
    %74 = arith.addf %69, %73 : vector<16x128xf32>
    %75 = vector.extract_strided_slice %60 {offsets = [0, 384], sizes = [16, 128], strides = [1, 1]} : vector<16x512xf32> to vector<16x128xf32>
    %76 = arith.addf %74, %75 : vector<16x128xf32>
    %77 = math.tanh %76 : vector<16x128xf32>
    %78 = vector.extract_strided_slice %77 {offsets = [0, 0], sizes = [16, 16], strides = [1, 1]} : vector<16x128xf32> to vector<16x16xf32>
    %c56 = arith.constant 56 : index
    %c0_75 = arith.constant 0 : index
    %79 = vector.load %arg2[%c56, %c0_75] : memref<200x512xf32, #tpu.memory_space<vmem>>, vector<16x256xf32>
    %cst_76 = arith.constant dense<0.000000e+00> : vector<16x256xf32>
    %80 = tpu.matmul %78, %79, %cst_76 {dimension_numbers = #tpu.dot_dimension_numbers<[1], [0], [0], [1], [0, 0, 1, 1], [], []>} : vector<16x16xf32>, vector<16x256xf32>, vector<16x256xf32> -> vector<16x256xf32>
    %c72 = arith.constant 72 : index
    %c0_77 = arith.constant 0 : index
    %81 = vector.load %arg2[%c72, %c0_77] : memref<200x512xf32, #tpu.memory_space<vmem>>, vector<8x256xf32>
    %cst_78 = arith.constant dense<0.000000e+00> : vector<16x256xf32>
    %82 = tpu.matmul %32, %81, %cst_78 {dimension_numbers = #tpu.dot_dimension_numbers<[1], [0], [0], [1], [0, 0, 1, 1], [], []>} : vector<16x8xf32>, vector<8x256xf32>, vector<16x256xf32> -> vector<16x256xf32>
    %83 = arith.addf %80, %82 : vector<16x256xf32>
    %c80 = arith.constant 80 : index
    %c0_79 = arith.constant 0 : index
    %84 = vector.load %arg2[%c80, %c0_79] : memref<200x512xf32, #tpu.memory_space<vmem>>, vector<1x256xf32>
    %85 = vector.broadcast %84 : vector<1x256xf32> to vector<16x256xf32>
    %86 = arith.addf %83, %85 : vector<16x256xf32>
    %87 = vector.extract_strided_slice %86 {offsets = [0, 0], sizes = [16, 128], strides = [1, 1]} : vector<16x256xf32> to vector<16x128xf32>
    %88 = arith.negf %87 : vector<16x128xf32>
    %89 = math.exp %88 : vector<16x128xf32>
    %cst_80 = arith.constant 1.000000e+00 : f32
    %90 = vector.broadcast %cst_80 : f32 to vector<16x128xf32>
    %91 = arith.addf %90, %89 : vector<16x128xf32>
    %92 = arith.divf %90, %91 : vector<16x128xf32>
    %93 = vector.extract_strided_slice %86 {offsets = [0, 128], sizes = [16, 128], strides = [1, 1]} : vector<16x256xf32> to vector<16x128xf32>
    %94 = math.tanh %93 : vector<16x128xf32>
    %95 = arith.mulf %92, %94 : vector<16x128xf32>
    %c88 = arith.constant 88 : index
    %c0_81 = arith.constant 0 : index
    %96 = vector.load %arg2[%c88, %c0_81] : memref<200x512xf32, #tpu.memory_space<vmem>>, vector<2x16xf32>
    %cst_82 = arith.constant dense<0.000000e+00> : vector<2x128xf32>
    %97 = tpu.matmul %96, %95, %cst_82 {dimension_numbers = #tpu.dot_dimension_numbers<[1], [0], [0], [1], [0, 0, 1, 1], [], []>} : vector<2x16xf32>, vector<16x128xf32>, vector<2x128xf32> -> vector<2x128xf32>
    %98 = math.tanh %97 : vector<2x128xf32>
    %99 = vector.extract_strided_slice %98 {offsets = [0, 0], sizes = [2, 32], strides = [1, 1]} : vector<2x128xf32> to vector<2x32xf32>
    %c96 = arith.constant 96 : index
    %c0_83 = arith.constant 0 : index
    %100 = vector.load %arg2[%c96, %c0_83] : memref<200x512xf32, #tpu.memory_space<vmem>>, vector<32x128xf32>
    %cst_84 = arith.constant dense<0.000000e+00> : vector<2x128xf32>
    %101 = tpu.matmul %99, %100, %cst_84 {dimension_numbers = #tpu.dot_dimension_numbers<[1], [0], [0], [1], [0, 0, 1, 1], [], []>} : vector<2x32xf32>, vector<32x128xf32>, vector<2x128xf32> -> vector<2x128xf32>
    %c128 = arith.constant 128 : index
    %c0_85 = arith.constant 0 : index
    %102 = vector.load %arg2[%c128, %c0_85] : memref<200x512xf32, #tpu.memory_space<vmem>>, vector<1x128xf32>
    %103 = vector.broadcast %102 : vector<1x128xf32> to vector<2x128xf32>
    %104 = arith.addf %101, %103 : vector<2x128xf32>
    %105 = math.tanh %104 : vector<2x128xf32>
    %106 = vector.extract_strided_slice %105 {offsets = [0, 0], sizes = [2, 32], strides = [1, 1]} : vector<2x128xf32> to vector<2x32xf32>
    %c136 = arith.constant 136 : index
    %c0_86 = arith.constant 0 : index
    %107 = vector.load %arg2[%c136, %c0_86] : memref<200x512xf32, #tpu.memory_space<vmem>>, vector<32x128xf32>
    %cst_87 = arith.constant dense<0.000000e+00> : vector<2x128xf32>
    %108 = tpu.matmul %106, %107, %cst_87 {dimension_numbers = #tpu.dot_dimension_numbers<[1], [0], [0], [1], [0, 0, 1, 1], [], []>} : vector<2x32xf32>, vector<32x128xf32>, vector<2x128xf32> -> vector<2x128xf32>
    %c168 = arith.constant 168 : index
    %c0_88 = arith.constant 0 : index
    %109 = vector.load %arg2[%c168, %c0_88] : memref<200x512xf32, #tpu.memory_space<vmem>>, vector<1x128xf32>
    %110 = vector.broadcast %109 : vector<1x128xf32> to vector<2x128xf32>
    %111 = arith.addf %108, %110 : vector<2x128xf32>
    %112 = math.tanh %111 : vector<2x128xf32>
    %113 = vector.extract_strided_slice %112 {offsets = [0, 0], sizes = [2, 16], strides = [1, 1]} : vector<2x128xf32> to vector<2x16xf32>
    %c176 = arith.constant 176 : index
    %c0_89 = arith.constant 0 : index
    %114 = vector.load %arg2[%c176, %c0_89] : memref<200x512xf32, #tpu.memory_space<vmem>>, vector<16x128xf32>
    %cst_90 = arith.constant dense<0.000000e+00> : vector<2x128xf32>
    %115 = tpu.matmul %113, %114, %cst_90 {dimension_numbers = #tpu.dot_dimension_numbers<[1], [0], [0], [1], [0, 0, 1, 1], [], []>} : vector<2x16xf32>, vector<16x128xf32>, vector<2x128xf32> -> vector<2x128xf32>
    %c192 = arith.constant 192 : index
    %c0_91 = arith.constant 0 : index
    %116 = vector.load %arg2[%c192, %c0_91] : memref<200x512xf32, #tpu.memory_space<vmem>>, vector<1x128xf32>
    %117 = vector.broadcast %116 : vector<1x128xf32> to vector<2x128xf32>
    %118 = arith.addf %115, %117 : vector<2x128xf32>
    %c0_92 = arith.constant 0 : index
    %c0_93 = arith.constant 0 : index
    %119 = vector.load %arg3[%c0_92, %c0_93] : memref<2x128xf32, #tpu.memory_space<vmem>>, vector<2x128xf32>
    tpu.vector_store %arg3[%c0_92, %c0_93], %118 {strides = array<i32>} : memref<2x128xf32, #tpu.memory_space<vmem>>, vector<2x128xf32>,
    return
  }
}

</mosaic_0001>

<llo_original>
// kernel: discriminator_forward.1
$region0: #{discriminator_forward.1}
  #allocation0 [shape = 'u32[]', space=smem, size = 0x4, offset = 0x4, fixed_abs, tag = 'smem constant byte address 0x4 - core index']
  #allocation1 [shape = 'u32[72,128]{1,0:T(1,128)}', space=vmem, size = 0x9000, scoped, tag = 'internal scratch']
  #allocation2 [shape = 'f32[3,16,16]{2,1,0:T(8,128)}', space=vmem, size = 0x6000, scoped, tag = 'scratch operand']
  %s0 = inlined_call_operand.vmem [shape: f32[16,8], index: 0, kind: input, shape index: {}]
  %s1 = inlined_call_operand.vmem [shape: f32[3,2,8,8], index: 1, kind: input, shape index: {}]
  %s2 = inlined_call_operand.hbm [shape: f32[200,512], index: 2, kind: input, shape index: {}]
  %s3 = inlined_call_operand.vmem [shape: f32[2,128], index: 3, kind: output, shape index: {}]
  %s4 = sld [smem:[#allocation0]]
  $region26: #{discriminator_forward.1} parent=0
    _
  %s6 = ssub.s32 1, %s4
  %s7 = scalar_select 0, %s6, %s4
  $region1: #{discriminator_forward.1} parent=0
    #allocation3 [shape = 'u8[409600]{0}', space=vmem, size = 0x64000, scoped, tag = 'input window, operand 2, single buffered']
    #allocation4 [shape = 's32[1]{0}', space=sflag, size = 0x4, scoped, tag = 'scoped memory for discriminator_forward.1']
    %8 = vsyncpa [#allocation4], 0
    // Predicated region
    $region2: #{discriminator_forward.1} parent=1 // pred_check
      _
    $region3: #{discriminator_forward.1} parent=1 // pred_check_branch
      %10 = sbr.rel (0) target = $region5
    $region4: #{discriminator_forward.1} parent=1 // pred_region
      _
    $region5: #{discriminator_forward.1} parent=1 // pred_fallthru
      _
    // Predicated region
    $region6: #{discriminator_forward.1} parent=1 // pred_check
      _
    $region7: #{discriminator_forward.1} parent=1 // pred_check_branch
      %12 = sbr.rel (0) target = $region9
    $region8: #{discriminator_forward.1} parent=1 // pred_region
      _
    $region9: #{discriminator_forward.1} parent=1 // pred_fallthru
      _
    // Predicated region
    $region10: #{discriminator_forward.1} parent=1 // pred_check
      _
    $region11: #{discriminator_forward.1} parent=1 // pred_check_branch
      %14 = sbr.rel (0) target = $region13
    $region12: #{discriminator_forward.1} parent=1 // pred_region
      %16 = vsyncadd [#allocation4], 0
      %s17 = sshll.u32 %s2, 4
      %s18 = int_to_ptr.hbm [resolvable:$true] %s17
      %s19 = sshll.u32 [#allocation3], 4
      %s20 = int_to_ptr.vmem [resolvable:$true] %s19
      %25 = dma.hbm_to_vmem [thread:$0]  %s18, 12800, %s20, [#allocation4], 512, 512, 32
    $region13: #{discriminator_forward.1} parent=1 // pred_fallthru
      _
    // Predicated region
    $region14: #{discriminator_forward.1} parent=1 // pred_check
      _
    $region15: #{discriminator_forward.1} parent=1 // pred_check_branch
      %27 = sbr.rel (0) target = $region17
    $region16: #{discriminator_forward.1} parent=1 // pred_region
      %29 = dma.done [#allocation4], 12800
    $region17: #{discriminator_forward.1} parent=1 // pred_fallthru
      _
    %vm30 = vcmask 130048
    %31 = vst.msk [vmem:[#allocation2] sm:$0xff] %vm30, 0.0
    %32 = vst.msk [vmem:[#allocation2 + $0x8] sm:$0xff] %vm30, 0.0
    %33 = vst.msk [vmem:[#allocation2 + $0x10] sm:$0xff] %vm30, 0.0
    %34 = vst.msk [vmem:[#allocation2 + $0x18] sm:$0xff] %vm30, 0.0
    %35 = vst.msk [vmem:[#allocation2 + $0x20] sm:$0xff] %vm30, 0.0
    %36 = vst.msk [vmem:[#allocation2 + $0x28] sm:$0xff] %vm30, 0.0
    %v37 = vld [vmem:[%s1] sm:$0xff]
    %vm38 = vcmask 64512
    %39 = vst.msk [vmem:[#allocation2] sm:$0xff] %vm38, %v37
    %s40 = scalar_lea.vmem %s1, 8
    %v41 = vld [vmem:[%s40] sm:$0xff]
    %43 = vrot.lane.b32.xlu0 %v41, 8
    %v44 = vpop.permute.xlu0 %43
    %vm46 = vcmask 130112
    %47 = vst.msk [vmem:[#allocation2 + $0x8] sm:$0xff] %vm46, %v44
    %s48 = scalar_lea.vmem %s1, 16
    %v49 = vld [vmem:[%s48] sm:$0xff]
    %s50 = scalar_lea.vmem [#allocation2], 16
    %51 = vst.msk [vmem:[%s50] sm:$0xff] %vm38, %v49
    %s52 = scalar_lea.vmem %s1, 24
    %v53 = vld [vmem:[%s52] sm:$0xff]
    %55 = vrot.lane.b32.xlu0 %v53, 8
    %v56 = vpop.permute.xlu0 %55
    %58 = vst.msk [vmem:[%s50 + $0x8] sm:$0xff] %vm46, %v56
    %s59 = scalar_lea.vmem %s1, 32
    %v60 = vld [vmem:[%s59] sm:$0xff]
    %s61 = scalar_lea.vmem [#allocation2], 32
    %62 = vst.msk [vmem:[%s61] sm:$0xff] %vm38, %v60
    %s63 = scalar_lea.vmem %s1, 40
    %v64 = vld [vmem:[%s63] sm:$0xff]
    %66 = vrot.lane.b32.xlu0 %v64, 8
    %v67 = vpop.permute.xlu0 %66
    %69 = vst.msk [vmem:[%s61 + $0x8] sm:$0xff] %vm46, %v67
    %v70 = vld [vmem:[%s0] sm:$0xff]
    %v71 = vld [vmem:[%s0 + $0x8] sm:$0xff]
    %v72 = vld [vmem:[#allocation3] sm:$0xff]
    %v73 = vld [vmem:[#allocation3 + $0x8] sm:$0xff]
    %v74 = vld [vmem:[#allocation3 + $0x10] sm:$0xff]
    %v75 = vld [vmem:[#allocation3 + $0x18] sm:$0xff]
    %s76 = scalar_lea.vmem [#allocation3], 32
    %v77 = vld [vmem:[%s76] ss:$8 sm:$0xf]
    %v79 = vperm.slane %v77, 0
    %v80 = vperm.slane %v77, 1
    %v81 = vperm.slane %v77, 2
    %v82 = vperm.slane %v77, 3
    %v88 = vsel %vm38, %v70, 0
    %v91 = vsel %vm38, %v71, 0
    %93 = vmatpush.msra.mxu0 0.0
    %94 = vmatpush.msra.mxu0 0.0
    %95 = vmatpush.msra.mxu0 0.0
    %96 = vmatpush.msra.mxu0 0.0
    %97 = vmatpush.msra.mxu0 0.0
    %98 = vmatpush.msra.mxu0 0.0
    %99 = vmatpush.msra.mxu0 0.0
    %100 = vmatpush.msra.mxu0 0.0
    %101 = vmatpush.msra.mxu0 0.0
    %102 = vmatpush.msra.mxu0 0.0
    %103 = vmatpush.msra.mxu0 0.0
    %104 = vmatpush.msra.mxu0 0.0
    %105 = vmatpush.msra.mxu0 0.0
    %106 = vmatpush.msra.mxu0 0.0
    %107 = vmatpush.msra.mxu0 0.0
    %108 = vmatpush.msra.mxu0 %v72
    %109 = vmatmul.f32.gmra.mxu0 %v88
    %v110 = vpop.f32.mrf.mxu0
    %v111 = vadd.f32 %v79, %v110
    %112 = vmatmul.f32.gmra.mxu0 %v91
    %v113 = vpop.f32.mrf.mxu0
    %v114 = vadd.f32 %v79, %v113
    %115 = vdwg.mxu0
    %116 = vmatpush.msra.mxu0 0.0
    %117 = vmatpush.msra.mxu0 0.0
    %118 = vmatpush.msra.mxu0 0.0
    %119 = vmatpush.msra.mxu0 0.0
    %120 = vmatpush.msra.mxu0 0.0
    %121 = vmatpush.msra.mxu0 0.0
    %122 = vmatpush.msra.mxu0 0.0
    %123 = vmatpush.msra.mxu0 0.0
    %124 = vmatpush.msra.mxu0 0.0
    %125 = vmatpush.msra.mxu0 0.0
    %126 = vmatpush.msra.mxu0 0.0
    %127 = vmatpush.msra.mxu0 0.0
    %128 = vmatpush.msra.mxu0 0.0
    %129 = vmatpush.msra.mxu0 0.0
    %130 = vmatpush.msra.mxu0 0.0
    %131 = vmatpush.msra.mxu0 %v73
    %132 = vmatmul.f32.gmra.mxu0 %v88
    %v133 = vpop.f32.mrf.mxu0
    %v134 = vadd.f32 %v80, %v133
    %135 = vmatmul.f32.gmra.mxu0 %v91
    %v136 = vpop.f32.mrf.mxu0
    %v137 = vadd.f32 %v80, %v136
    %138 = vdwg.mxu0
    %139 = vmatpush.msra.mxu0 0.0
    %140 = vmatpush.msra.mxu0 0.0
    %141 = vmatpush.msra.mxu0 0.0
    %142 = vmatpush.msra.mxu0 0.0
    %143 = vmatpush.msra.mxu0 0.0
    %144 = vmatpush.msra.mxu0 0.0
    %145 = vmatpush.msra.mxu0 0.0
    %146 = vmatpush.msra.mxu0 0.0
    %147 = vmatpush.msra.mxu0 0.0
    %148 = vmatpush.msra.mxu0 0.0
    %149 = vmatpush.msra.mxu0 0.0
    %150 = vmatpush.msra.mxu0 0.0
    %151 = vmatpush.msra.mxu0 0.0
    %152 = vmatpush.msra.mxu0 0.0
    %153 = vmatpush.msra.mxu0 0.0
    %154 = vmatpush.msra.mxu0 %v74
    %155 = vmatmul.f32.gmra.mxu0 %v88
    %v156 = vpop.f32.mrf.mxu0
    %v157 = vadd.f32 %v81, %v156
    %158 = vmatmul.f32.gmra.mxu0 %v91
    %v159 = vpop.f32.mrf.mxu0
    %v160 = vadd.f32 %v81, %v159
    %161 = vdwg.mxu0
    %162 = vmatpush.msra.mxu0 0.0
    %163 = vmatpush.msra.mxu0 0.0
    %164 = vmatpush.msra.mxu0 0.0
    %165 = vmatpush.msra.mxu0 0.0
    %166 = vmatpush.msra.mxu0 0.0
    %167 = vmatpush.msra.mxu0 0.0
    %168 = vmatpush.msra.mxu0 0.0
    %169 = vmatpush.msra.mxu0 0.0
    %170 = vmatpush.msra.mxu0 0.0
    %171 = vmatpush.msra.mxu0 0.0
    %172 = vmatpush.msra.mxu0 0.0
    %173 = vmatpush.msra.mxu0 0.0
    %174 = vmatpush.msra.mxu0 0.0
    %175 = vmatpush.msra.mxu0 0.0
    %176 = vmatpush.msra.mxu0 0.0
    %177 = vmatpush.msra.mxu0 %v75
    %178 = vmatmul.f32.gmra.mxu0 %v88
    %v179 = vpop.f32.mrf.mxu0
    %v180 = vadd.f32 %v82, %v179
    %181 = vmatmul.f32.gmra.mxu0 %v91
    %v182 = vpop.f32.mrf.mxu0
    %v183 = vadd.f32 %v82, %v182
    %184 = vdwg.mxu0
    %v185 = vld [vmem:[#allocation2] sm:$0xff]
    %v186 = vld [vmem:[#allocation2 + $0x8] sm:$0xff]
    %v187 = vld [vmem:[%s50] sm:$0xff]
    %v188 = vld [vmem:[%s50 + $0x8] sm:$0xff]
    %v190 = vsel %vm30, %v187, 0
    %v193 = vsel %vm30, %v188, 0
    %195 = vmatpush.msra.mxu0 0.0
    %196 = vmatpush.msra.mxu0 0.0
    %197 = vmatpush.msra.mxu0 0.0
    %198 = vmatpush.msra.mxu0 0.0
    %199 = vmatpush.msra.mxu0 0.0
    %200 = vmatpush.msra.mxu0 0.0
    %201 = vmatpush.msra.mxu0 0.0
    %202 = vmatpush.msra.mxu0 0.0
    %203 = vmatpush.msra.mxu0 0.0
    %204 = vmatpush.msra.mxu0 0.0
    %205 = vmatpush.msra.mxu0 0.0
    %206 = vmatpush.msra.mxu0 0.0
    %207 = vmatpush.msra.mxu0 0.0
    %208 = vmatpush.msra.mxu0 0.0
    %209 = vmatpush.msra.mxu0 %v137
    %210 = vmatpush.msra.mxu0 %v134
    %211 = vmatmul.f32.gmra.mxu0 %v190
    %v212 = vpop.f32.mrf.mxu0
    %v213 = vadd.f32 0.0, %v212
    %214 = vmatmul.f32.gmra.mxu0 %v193
    %v215 = vpop.f32.mrf.mxu0
    %v216 = vadd.f32 0.0, %v215
    %217 = vdwg.mxu0
    %v219 = vsel %vm30, %v185, 0
    %v222 = vsel %vm30, %v186, 0
    %224 = vmatpush.msra.mxu0 0.0
    %225 = vmatpush.msra.mxu0 0.0
    %226 = vmatpush.msra.mxu0 0.0
    %227 = vmatpush.msra.mxu0 0.0
    %228 = vmatpush.msra.mxu0 0.0
    %229 = vmatpush.msra.mxu0 0.0
    %230 = vmatpush.msra.mxu0 0.0
    %231 = vmatpush.msra.mxu0 0.0
    %232 = vmatpush.msra.mxu0 0.0
    %233 = vmatpush.msra.mxu0 0.0
    %234 = vmatpush.msra.mxu0 0.0
    %235 = vmatpush.msra.mxu0 0.0
    %236 = vmatpush.msra.mxu0 0.0
    %237 = vmatpush.msra.mxu0 0.0
    %238 = vmatpush.msra.mxu0 %v114
    %239 = vmatpush.msra.mxu0 %v111
    %240 = vmatmul.f32.gmra.mxu0 %v219
    %v241 = vpop.f32.mrf.mxu0
    %v242 = vadd.f32 %v213, %v241
    %243 = vmatmul.f32.gmra.mxu0 %v222
    %v244 = vpop.f32.mrf.mxu0
    %v245 = vadd.f32 %v216, %v244
    %246 = vdwg.mxu0
    %v247 = vld [vmem:[%s61] sm:$0xff]
    %v248 = vld [vmem:[%s61 + $0x8] sm:$0xff]
    %v250 = vsel %vm30, %v247, 0
    %v253 = vsel %vm30, %v248, 0
    %255 = vmatpush.msra.mxu0 0.0
    %256 = vmatpush.msra.mxu0 0.0
    %257 = vmatpush.msra.mxu0 0.0
    %258 = vmatpush.msra.mxu0 0.0
    %259 = vmatpush.msra.mxu0 0.0
    %260 = vmatpush.msra.mxu0 0.0
    %261 = vmatpush.msra.mxu0 0.0
    %262 = vmatpush.msra.mxu0 0.0
    %263 = vmatpush.msra.mxu0 0.0
    %264 = vmatpush.msra.mxu0 0.0
    %265 = vmatpush.msra.mxu0 0.0
    %266 = vmatpush.msra.mxu0 0.0
    %267 = vmatpush.msra.mxu0 0.0
    %268 = vmatpush.msra.mxu0 0.0
    %269 = vmatpush.msra.mxu0 %v160
    %270 = vmatpush.msra.mxu0 %v157
    %271 = vmatmul.f32.gmra.mxu0 %v250
    %v272 = vpop.f32.mrf.mxu0
    %v273 = vadd.f32 0.0, %v272
    %274 = vmatmul.f32.gmra.mxu0 %v253
    %v275 = vpop.f32.mrf.mxu0
    %v276 = vadd.f32 0.0, %v275
    %277 = vdwg.mxu0
    %v278 = vadd.f32 %v242, %v273
    %v279 = vadd.f32 %v245, %v276
    %v280 = vadd.f32 %v278, %v180
    %v281 = vadd.f32 %v279, %v183
    %v282 = vtanh.pop %v280
    %v283 = vtanh.pop %v281
    %v284 = vld [vmem:[#allocation3 + $0x40] sm:$0xff]
    %v285 = vld [vmem:[#allocation3 + $0x48] sm:$0xff]
    %v286 = vld [vmem:[#allocation3 + $0x50] sm:$0xff]
    %v287 = vld [vmem:[#allocation3 + $0x58] sm:$0xff]
    %v288 = vld [vmem:[#allocation3 + $0x60] sm:$0xff]
    %v289 = vld [vmem:[#allocation3 + $0x68] sm:$0xff]
    %v290 = vld [vmem:[#allocation3 + $0x70] sm:$0xff]
    %v291 = vld [vmem:[#allocation3 + $0x78] sm:$0xff]
    %v292 = vld [vmem:[#allocation3 + $0x80] sm:$0xff]
    %v293 = vld [vmem:[#allocation3 + $0x88] sm:$0xff]
    %v294 = vld [vmem:[#allocation3 + $0x90] sm:$0xff]
    %v295 = vld [vmem:[#allocation3 + $0x98] sm:$0xff]
    %v296 = vld [vmem:[#allocation3 + $0xa0] sm:$0xff]
    %v297 = vld [vmem:[#allocation3 + $0xa8] sm:$0xff]
    %v298 = vld [vmem:[#allocation3 + $0xb0] sm:$0xff]
    %v299 = vld [vmem:[#allocation3 + $0xb8] sm:$0xff]
    %s300 = scalar_lea.vmem [#allocation3], 192
    %v301 = vld [vmem:[%s300] ss:$8 sm:$0xf]
    %v303 = vperm.slane %v301, 0
    %v304 = vperm.slane %v301, 1
    %v305 = vperm.slane %v301, 2
    %v306 = vperm.slane %v301, 3
    %vm311 = vcmask 261120
    %v313 = vsel %vm311, %v282, 0
    %v316 = vsel %vm311, %v283, 0
    %318 = vmatpush.msra.mxu0 0.0
    %319 = vmatpush.msra.mxu0 0.0
    %320 = vmatpush.msra.mxu0 0.0
    %321 = vmatpush.msra.mxu0 0.0
    %322 = vmatpush.msra.mxu0 0.0
    %323 = vmatpush.msra.mxu0 0.0
    %324 = vmatpush.msra.mxu0 0.0
    %325 = vmatpush.msra.mxu0 0.0
    %326 = vmatpush.msra.mxu0 0.0
    %327 = vmatpush.msra.mxu0 0.0
    %328 = vmatpush.msra.mxu0 0.0
    %329 = vmatpush.msra.mxu0 0.0
    %330 = vmatpush.msra.mxu0 %v296
    %331 = vmatpush.msra.mxu0 %v292
    %332 = vmatpush.msra.mxu0 %v288
    %333 = vmatpush.msra.mxu0 %v284
    %334 = vmatmul.f32.gmra.mxu0 %v313
    %v335 = vpop.f32.mrf.mxu0
    %v336 = vadd.f32 %v303, %v335
    %337 = vmatmul.f32.gmra.mxu0 %v316
    %v338 = vpop.f32.mrf.mxu0
    %v339 = vadd.f32 %v303, %v338
    %340 = vdwg.mxu0
    %341 = vmatpush.msra.mxu0 0.0
    %342 = vmatpush.msra.mxu0 0.0
    %343 = vmatpush.msra.mxu0 0.0
    %344 = vmatpush.msra.mxu0 0.0
    %345 = vmatpush.msra.mxu0 0.0
    %346 = vmatpush.msra.mxu0 0.0
    %347 = vmatpush.msra.mxu0 0.0
    %348 = vmatpush.msra.mxu0 0.0
    %349 = vmatpush.msra.mxu0 0.0
    %350 = vmatpush.msra.mxu0 0.0
    %351 = vmatpush.msra.mxu0 0.0
    %352 = vmatpush.msra.mxu0 0.0
    %353 = vmatpush.msra.mxu0 %v297
    %354 = vmatpush.msra.mxu0 %v293
    %355 = vmatpush.msra.mxu0 %v289
    %356 = vmatpush.msra.mxu0 %v285
    %357 = vmatmul.f32.gmra.mxu0 %v313
    %v358 = vpop.f32.mrf.mxu0
    %v359 = vadd.f32 %v304, %v358
    %360 = vmatmul.f32.gmra.mxu0 %v316
    %v361 = vpop.f32.mrf.mxu0
    %v362 = vadd.f32 %v304, %v361
    %363 = vdwg.mxu0
    %364 = vmatpush.msra.mxu0 0.0
    %365 = vmatpush.msra.mxu0 0.0
    %366 = vmatpush.msra.mxu0 0.0
    %367 = vmatpush.msra.mxu0 0.0
    %368 = vmatpush.msra.mxu0 0.0
    %369 = vmatpush.msra.mxu0 0.0
    %370 = vmatpush.msra.mxu0 0.0
    %371 = vmatpush.msra.mxu0 0.0
    %372 = vmatpush.msra.mxu0 0.0
    %373 = vmatpush.msra.mxu0 0.0
    %374 = vmatpush.msra.mxu0 0.0
    %375 = vmatpush.msra.mxu0 0.0
    %376 = vmatpush.msra.mxu0 %v298
    %377 = vmatpush.msra.mxu0 %v294
    %378 = vmatpush.msra.mxu0 %v290
    %379 = vmatpush.msra.mxu0 %v286
    %380 = vmatmul.f32.gmra.mxu0 %v313
    %v381 = vpop.f32.mrf.mxu0
    %v382 = vadd.f32 %v305, %v381
    %383 = vmatmul.f32.gmra.mxu0 %v316
    %v384 = vpop.f32.mrf.mxu0
    %v385 = vadd.f32 %v305, %v384
    %386 = vdwg.mxu0
    %387 = vmatpush.msra.mxu0 0.0
    %388 = vmatpush.msra.mxu0 0.0
    %389 = vmatpush.msra.mxu0 0.0
    %390 = vmatpush.msra.mxu0 0.0
    %391 = vmatpush.msra.mxu0 0.0
    %392 = vmatpush.msra.mxu0 0.0
    %393 = vmatpush.msra.mxu0 0.0
    %394 = vmatpush.msra.mxu0 0.0
    %395 = vmatpush.msra.mxu0 0.0
    %396 = vmatpush.msra.mxu0 0.0
    %397 = vmatpush.msra.mxu0 0.0
    %398 = vmatpush.msra.mxu0 0.0
    %399 = vmatpush.msra.mxu0 %v299
    %400 = vmatpush.msra.mxu0 %v295
    %401 = vmatpush.msra.mxu0 %v291
    %402 = vmatpush.msra.mxu0 %v287
    %403 = vmatmul.f32.gmra.mxu0 %v313
    %v404 = vpop.f32.mrf.mxu0
    %v405 = vadd.f32 %v306, %v404
    %406 = vmatmul.f32.gmra.mxu0 %v316
    %v407 = vpop.f32.mrf.mxu0
    %v408 = vadd.f32 %v306, %v407
    %409 = vdwg.mxu0
    %410 = vmatpush.msra.mxu0 0.0
    %411 = vmatpush.msra.mxu0 0.0
    %412 = vmatpush.msra.mxu0 0.0
    %413 = vmatpush.msra.mxu0 0.0
    %414 = vmatpush.msra.mxu0 0.0
    %415 = vmatpush.msra.mxu0 0.0
    %416 = vmatpush.msra.mxu0 0.0
    %417 = vmatpush.msra.mxu0 0.0
    %418 = vmatpush.msra.mxu0 0.0
    %419 = vmatpush.msra.mxu0 0.0
    %420 = vmatpush.msra.mxu0 0.0
    %421 = vmatpush.msra.mxu0 0.0
    %422 = vmatpush.msra.mxu0 0.0
    %423 = vmatpush.msra.mxu0 0.0
    %424 = vmatpush.msra.mxu0 %v362
    %425 = vmatpush.msra.mxu0 %v359
    %426 = vmatmul.f32.gmra.mxu0 %v190
    %v427 = vpop.f32.mrf.mxu0
    %v428 = vadd.f32 0.0, %v427
    %429 = vmatmul.f32.gmra.mxu0 %v193
    %v430 = vpop.f32.mrf.mxu0
    %v431 = vadd.f32 0.0, %v430
    %432 = vdwg.mxu0
    %433 = vmatpush.msra.mxu0 0.0
    %434 = vmatpush.msra.mxu0 0.0
    %435 = vmatpush.msra.mxu0 0.0
    %436 = vmatpush.msra.mxu0 0.0
    %437 = vmatpush.msra.mxu0 0.0
    %438 = vmatpush.msra.mxu0 0.0
    %439 = vmatpush.msra.mxu0 0.0
    %440 = vmatpush.msra.mxu0 0.0
    %441 = vmatpush.msra.mxu0 0.0
    %442 = vmatpush.msra.mxu0 0.0
    %443 = vmatpush.msra.mxu0 0.0
    %444 = vmatpush.msra.mxu0 0.0
    %445 = vmatpush.msra.mxu0 0.0
    %446 = vmatpush.msra.mxu0 0.0
    %447 = vmatpush.msra.mxu0 %v339
    %448 = vmatpush.msra.mxu0 %v336
    %449 = vmatmul.f32.gmra.mxu0 %v219
    %v450 = vpop.f32.mrf.mxu0
    %v451 = vadd.f32 %v428, %v450
    %452 = vmatmul.f32.gmra.mxu0 %v222
    %v453 = vpop.f32.mrf.mxu0
    %v454 = vadd.f32 %v431, %v453
    %455 = vdwg.mxu0
    %456 = vmatpush.msra.mxu0 0.0
    %457 = vmatpush.msra.mxu0 0.0
    %458 = vmatpush.msra.mxu0 0.0
    %459 = vmatpush.msra.mxu0 0.0
    %460 = vmatpush.msra.mxu0 0.0
    %461 = vmatpush.msra.mxu0 0.0
    %462 = vmatpush.msra.mxu0 0.0
    %463 = vmatpush.msra.mxu0 0.0
    %464 = vmatpush.msra.mxu0 0.0
    %465 = vmatpush.msra.mxu0 0.0
    %466 = vmatpush.msra.mxu0 0.0
    %467 = vmatpush.msra.mxu0 0.0
    %468 = vmatpush.msra.mxu0 0.0
    %469 = vmatpush.msra.mxu0 0.0
    %470 = vmatpush.msra.mxu0 %v385
    %471 = vmatpush.msra.mxu0 %v382
    %472 = vmatmul.f32.gmra.mxu0 %v250
    %v473 = vpop.f32.mrf.mxu0
    %v474 = vadd.f32 0.0, %v473
    %475 = vmatmul.f32.gmra.mxu0 %v253
    %v476 = vpop.f32.mrf.mxu0
    %v477 = vadd.f32 0.0, %v476
    %478 = vdwg.mxu0
    %v479 = vadd.f32 %v451, %v474
    %v480 = vadd.f32 %v454, %v477
    %v481 = vadd.f32 %v479, %v405
    %v482 = vadd.f32 %v480, %v408
    %v483 = vtanh.pop %v481
    %v484 = vtanh.pop %v482
    %v485 = vld [vmem:[#allocation3 + $0xe0] sm:$0xff]
    %v486 = vld [vmem:[#allocation3 + $0xe8] sm:$0xff]
    %v487 = vld [vmem:[#allocation3 + $0x100] sm:$0xff]
    %v488 = vld [vmem:[#allocation3 + $0x108] sm:$0xff]
    %v489 = vld [vmem:[#allocation3 + $0x120] sm:$0xff]
    %v490 = vld [vmem:[#allocation3 + $0x128] sm:$0xff]
    %491 = vmatpush.msra.mxu0 0.0
    %492 = vmatpush.msra.mxu0 0.0
    %493 = vmatpush.msra.mxu0 0.0
    %494 = vmatpush.msra.mxu0 0.0
    %495 = vmatpush.msra.mxu0 0.0
    %496 = vmatpush.msra.mxu0 0.0
    %497 = vmatpush.msra.mxu0 0.0
    %498 = vmatpush.msra.mxu0 0.0
    %499 = vmatpush.msra.mxu0 0.0
    %500 = vmatpush.msra.mxu0 0.0
    %501 = vmatpush.msra.mxu0 0.0
    %502 = vmatpush.msra.mxu0 0.0
    %503 = vmatpush.msra.mxu0 0.0
    %504 = vmatpush.msra.mxu0 0.0
    %505 = vmatpush.msra.mxu0 0.0
    %506 = vmatpush.msra.mxu0 %v489
    %507 = vmatmul.f32.gmra.mxu0 %v88
    %v508 = vpop.f32.mrf.mxu0
    %v509 = vadd.f32 0.0, %v508
    %510 = vmatmul.f32.gmra.mxu0 %v91
    %v511 = vpop.f32.mrf.mxu0
    %v512 = vadd.f32 0.0, %v511
    %513 = vdwg.mxu0
    %514 = vmatpush.msra.mxu0 0.0
    %515 = vmatpush.msra.mxu0 0.0
    %516 = vmatpush.msra.mxu0 0.0
    %517 = vmatpush.msra.mxu0 0.0
    %518 = vmatpush.msra.mxu0 0.0
    %519 = vmatpush.msra.mxu0 0.0
    %520 = vmatpush.msra.mxu0 0.0
    %521 = vmatpush.msra.mxu0 0.0
    %522 = vmatpush.msra.mxu0 0.0
    %523 = vmatpush.msra.mxu0 0.0
    %524 = vmatpush.msra.mxu0 0.0
    %525 = vmatpush.msra.mxu0 0.0
    %526 = vmatpush.msra.mxu0 0.0
    %527 = vmatpush.msra.mxu0 0.0
    %528 = vmatpush.msra.mxu0 0.0
    %529 = vmatpush.msra.mxu0 %v490
    %530 = vmatmul.f32.gmra.mxu0 %v88
    %v531 = vpop.f32.mrf.mxu0
    %v532 = vadd.f32 0.0, %v531
    %533 = vmatmul.f32.gmra.mxu0 %v91
    %v534 = vpop.f32.mrf.mxu0
    %v535 = vadd.f32 0.0, %v534
    %536 = vdwg.mxu0
    %v538 = vsel %vm30, %v483, 0
    %v541 = vsel %vm30, %v484, 0
    %543 = vmatpush.msra.mxu0 0.0
    %544 = vmatpush.msra.mxu0 0.0
    %545 = vmatpush.msra.mxu0 0.0
    %546 = vmatpush.msra.mxu0 0.0
    %547 = vmatpush.msra.mxu0 0.0
    %548 = vmatpush.msra.mxu0 0.0
    %549 = vmatpush.msra.mxu0 0.0
    %550 = vmatpush.msra.mxu0 0.0
    %551 = vmatpush.msra.mxu0 0.0
    %552 = vmatpush.msra.mxu0 0.0
    %553 = vmatpush.msra.mxu0 0.0
    %554 = vmatpush.msra.mxu0 0.0
    %555 = vmatpush.msra.mxu0 0.0
    %556 = vmatpush.msra.mxu0 0.0
    %557 = vmatpush.msra.mxu0 %v487
    %558 = vmatpush.msra.mxu0 %v485
    %559 = vmatmul.f32.gmra.mxu0 %v538
    %v560 = vpop.f32.mrf.mxu0
    %v561 = vadd.f32 %v509, %v560
    %562 = vmatmul.f32.gmra.mxu0 %v541
    %v563 = vpop.f32.mrf.mxu0
    %v564 = vadd.f32 %v512, %v563
    %565 = vdwg.mxu0
    %566 = vmatpush.msra.mxu0 0.0
    %567 = vmatpush.msra.mxu0 0.0
    %568 = vmatpush.msra.mxu0 0.0
    %569 = vmatpush.msra.mxu0 0.0
    %570 = vmatpush.msra.mxu0 0.0
    %571 = vmatpush.msra.mxu0 0.0
    %572 = vmatpush.msra.mxu0 0.0
    %573 = vmatpush.msra.mxu0 0.0
    %574 = vmatpush.msra.mxu0 0.0
    %575 = vmatpush.msra.mxu0 0.0
    %576 = vmatpush.msra.mxu0 0.0
    %577 = vmatpush.msra.mxu0 0.0
    %578 = vmatpush.msra.mxu0 0.0
    %579 = vmatpush.msra.mxu0 0.0
    %580 = vmatpush.msra.mxu0 %v488
    %581 = vmatpush.msra.mxu0 %v486
    %582 = vmatmul.f32.gmra.mxu0 %v538
    %v583 = vpop.f32.mrf.mxu0
    %v584 = vadd.f32 %v532, %v583
    %585 = vmatmul.f32.gmra.mxu0 %v541
    %v586 = vpop.f32.mrf.mxu0
    %v587 = vadd.f32 %v535, %v586
    %588 = vdwg.mxu0
    %s589 = scalar_lea.vmem [#allocation3], 320
    %v590 = vld [vmem:[%s589] ss:$8 sm:$0x3]
    %v592 = vperm.slane %v590, 0
    %v593 = vperm.slane %v590, 1
    %v596 = vadd.f32 %v561, %v592
    %v597 = vadd.f32 %v584, %v593
    %v598 = vadd.f32 %v564, %v592
    %v599 = vadd.f32 %v587, %v593
    %v600 = vxor.u32 %v596, 2147483648
    %v601 = vxor.u32 %v598, 2147483648
    %v602 = vmul.f32 %v600, 1.442695
    %v603 = vpow.pop %v602
    %v604 = vmul.f32 %v601, 1.442695
    %v605 = vpow.pop %v604
    %v606 = vadd.f32 %v603, 1.0
    %v607 = vadd.f32 %v605, 1.0
    %v608 = vrcp.pop %v606
    %v609 = vmul.f32 %v606, %v608
    %v610 = vsub.f32 1.0, %v609
    %v611 = vmul.f32 %v608, %v610
    %v612 = vadd.f32 %v608, %v611
    %vm613 = vweird.f32 %v606
    %vm614 = vweird.f32 %v608
    %vm615 = vmor %vm613, %vm614
    %v616 = vsel %vm615, %v608, %v612
    %v617 = vand.u32 2147483647, %v606
    %vm618 = vcmp.eq.f32.partialorder %v617, 8.507059e+37
    %v619 = vand.u32 %v606, 2147483648
    %v620 = vor.u32 1.1754944e-38, %v619
    %v621 = vsel %vm618, %v620, %v616
    %v622 = vmul.f32 1.0, %v621
    %v623 = vrcp.pop %v607
    %v624 = vmul.f32 %v607, %v623
    %v625 = vsub.f32 1.0, %v624
    %v626 = vmul.f32 %v623, %v625
    %v627 = vadd.f32 %v623, %v626
    %vm628 = vweird.f32 %v607
    %vm629 = vweird.f32 %v623
    %vm630 = vmor %vm628, %vm629
    %v631 = vsel %vm630, %v623, %v627
    %v632 = vand.u32 2147483647, %v607
    %vm633 = vcmp.eq.f32.partialorder %v632, 8.507059e+37
    %v634 = vand.u32 %v607, 2147483648
    %v635 = vor.u32 1.1754944e-38, %v634
    %v636 = vsel %vm633, %v635, %v631
    %v637 = vmul.f32 1.0, %v636
    %v638 = vtanh.pop %v597
    %v639 = vtanh.pop %v599
    %v640 = vmul.f32 %v622, %v638
    %v641 = vmul.f32 %v637, %v639
    %v642 = vld [vmem:[#allocation3 + $0x160] sm:$0x3]
    %v644 = vsel %vm30, %v642, 0
    %646 = vmatpush.msra.mxu0 0.0
    %647 = vmatpush.msra.mxu0 0.0
    %648 = vmatpush.msra.mxu0 0.0
    %649 = vmatpush.msra.mxu0 0.0
    %650 = vmatpush.msra.mxu0 0.0
    %651 = vmatpush.msra.mxu0 0.0
    %652 = vmatpush.msra.mxu0 0.0
    %653 = vmatpush.msra.mxu0 0.0
    %654 = vmatpush.msra.mxu0 0.0
    %655 = vmatpush.msra.mxu0 0.0
    %656 = vmatpush.msra.mxu0 0.0
    %657 = vmatpush.msra.mxu0 0.0
    %658 = vmatpush.msra.mxu0 0.0
    %659 = vmatpush.msra.mxu0 0.0
    %660 = vmatpush.msra.mxu0 %v641
    %661 = vmatpush.msra.mxu0 %v640
    %662 = vmatmul.f32.gmra.mxu0 %v644
    %v663 = vpop.f32.mrf.mxu0
    %v664 = vadd.f32 0.0, %v663
    %665 = vdwg.mxu0
    %v666 = vtanh.pop %v664
    %v667 = vld [vmem:[#allocation3 + $0x180] sm:$0xff]
    %v668 = vld [vmem:[#allocation3 + $0x1a0] sm:$0xff]
    %v669 = vld [vmem:[#allocation3 + $0x1c0] sm:$0xff]
    %v670 = vld [vmem:[#allocation3 + $0x1e0] sm:$0xff]
    %v671 = vld [vmem:[#allocation3 + $0x200] ss:$0 sm:$0xff]
    %v673 = vsel %vm311, %v666, 0
    %675 = vmatpush.msra.mxu0 0.0
    %676 = vmatpush.msra.mxu0 0.0
    %677 = vmatpush.msra.mxu0 0.0
    %678 = vmatpush.msra.mxu0 0.0
    %679 = vmatpush.msra.mxu0 0.0
    %680 = vmatpush.msra.mxu0 0.0
    %681 = vmatpush.msra.mxu0 0.0
    %682 = vmatpush.msra.mxu0 0.0
    %683 = vmatpush.msra.mxu0 0.0
    %684 = vmatpush.msra.mxu0 0.0
    %685 = vmatpush.msra.mxu0 0.0
    %686 = vmatpush.msra.mxu0 0.0
    %687 = vmatpush.msra.mxu0 %v670
    %688 = vmatpush.msra.mxu0 %v669
    %689 = vmatpush.msra.mxu0 %v668
    %690 = vmatpush.msra.mxu0 %v667
    %691 = vmatmul.f32.gmra.mxu0 %v673
    %v692 = vpop.f32.mrf.mxu0
    %v693 = vadd.f32 %v671, %v692
    %694 = vdwg.mxu0
    %v695 = vtanh.pop %v693
    %v696 = vld [vmem:[#allocation3 + $0x220] sm:$0xff]
    %v697 = vld [vmem:[#allocation3 + $0x240] sm:$0xff]
    %v698 = vld [vmem:[#allocation3 + $0x260] sm:$0xff]
    %v699 = vld [vmem:[#allocation3 + $0x280] sm:$0xff]
    %v700 = vld [vmem:[#allocation3 + $0x2a0] ss:$0 sm:$0xff]
    %v702 = vsel %vm311, %v695, 0
    %704 = vmatpush.msra.mxu0 0.0
    %705 = vmatpush.msra.mxu0 0.0
    %706 = vmatpush.msra.mxu0 0.0
    %707 = vmatpush.msra.mxu0 0.0
    %708 = vmatpush.msra.mxu0 0.0
    %709 = vmatpush.msra.mxu0 0.0
    %710 = vmatpush.msra.mxu0 0.0
    %711 = vmatpush.msra.mxu0 0.0
    %712 = vmatpush.msra.mxu0 0.0
    %713 = vmatpush.msra.mxu0 0.0
    %714 = vmatpush.msra.mxu0 0.0
    %715 = vmatpush.msra.mxu0 0.0
    %716 = vmatpush.msra.mxu0 %v699
    %717 = vmatpush.msra.mxu0 %v698
    %718 = vmatpush.msra.mxu0 %v697
    %719 = vmatpush.msra.mxu0 %v696
    %720 = vmatmul.f32.gmra.mxu0 %v702
    %v721 = vpop.f32.mrf.mxu0
    %v722 = vadd.f32 %v700, %v721
    %723 = vdwg.mxu0
    %v724 = vtanh.pop %v722
    %v725 = vld [vmem:[#allocation3 + $0x2c0] sm:$0xff]
    %v726 = vld [vmem:[#allocation3 + $0x2e0] sm:$0xff]
    %v727 = vld [vmem:[#allocation3 + $0x300] ss:$0 sm:$0xff]
    %v729 = vsel %vm30, %v724, 0
    %731 = vmatpush.msra.mxu0 0.0
    %732 = vmatpush.msra.mxu0 0.0
    %733 = vmatpush.msra.mxu0 0.0
    %734 = vmatpush.msra.mxu0 0.0
    %735 = vmatpush.msra.mxu0 0.0
    %736 = vmatpush.msra.mxu0 0.0
    %737 = vmatpush.msra.mxu0 0.0
    %738 = vmatpush.msra.mxu0 0.0
    %739 = vmatpush.msra.mxu0 0.0
    %740 = vmatpush.msra.mxu0 0.0
    %741 = vmatpush.msra.mxu0 0.0
    %742 = vmatpush.msra.mxu0 0.0
    %743 = vmatpush.msra.mxu0 0.0
    %744 = vmatpush.msra.mxu0 0.0
    %745 = vmatpush.msra.mxu0 %v726
    %746 = vmatpush.msra.mxu0 %v725
    %747 = vmatmul.f32.gmra.mxu0 %v729
    %v748 = vpop.f32.mrf.mxu0
    %v749 = vadd.f32 %v727, %v748
    %750 = vdwg.mxu0
    %751 = vst [vmem:[%s3] sm:$0x3] %v749
    // Predicated region
    $region18: #{discriminator_forward.1} parent=1 // pred_check
      _
    $region19: #{discriminator_forward.1} parent=1 // pred_check_branch
      %753 = sbr.rel (0) target = $region21
    $region20: #{discriminator_forward.1} parent=1 // pred_region
      _
    $region21: #{discriminator_forward.1} parent=1 // pred_fallthru
      _
    // Predicated region
    $region22: #{discriminator_forward.1} parent=1 // pred_check
      _
    $region23: #{discriminator_forward.1} parent=1 // pred_check_branch
      %755 = sbr.rel (0) target = $region25
    $region24: #{discriminator_forward.1} parent=1 // pred_region
      _
    $region25: #{discriminator_forward.1} parent=1 // pred_fallthru
      _
    %756 = vsyncpa [#allocation4], 1

</llo_original>
